<compile_context>
chip_gen: v5e
topology: v5e:2x2
jax: 0.10.0
libtpu: 0.0.40
codegen_flags: <defaults>
</compile_context>

<pallas_src>
import functools
import math

import jax
import jax.numpy as jnp
import numpy as np
from jax import lax
from jax.experimental import pallas as pl
from jax.experimental.pallas import tpu as pltpu

EPS = 1e-5          # nn.BatchNorm2d default
NEG_SLOPE = 0.01    # nn.LeakyReLU default


def _build_taps(xs, C, W):
    """Build the 4 transposed-conv tap rows from the stacked input slab.

    xs : (2C, tm) f32, rows = dy*C + c  (dy in {0,1} = H shift), lane-dense M.
    Returns (4C, tm), rows = (dy*2 + dx)*C + c, where the dx=1 rows are the
    next-lane values masked to 0 where the source pixel falls off a W-row
    (b == W-1).  Requires tm % W == 0 so the mask is tile-position independent.
    """
    rows, tm = xs.shape
    nxt = jnp.concatenate([xs[:, 1:], jnp.zeros((rows, 1), xs.dtype)], axis=1)
    lane = lax.broadcasted_iota(jnp.int32, (1, tm), 1)
    nxt = jnp.where(lane % W == W - 1, jnp.float32(0.0), nxt)
    return jnp.concatenate([xs[:C], nxt[:C], xs[C:], nxt[C:]], axis=0)


def _stats_kernel(xs_ref, wc_ref, rm_ref, ssq_ref, *, C, W, M, tm):
    """Accumulate per-(phase, cout) sum of (conv - rowmean)^2 over real columns.

    xs_ref  : (2C, tm)   stacked x / H-shifted x, lane-dense along M
    wc_ref  : (4C, 4C)   phase-decomposed ConvTranspose2d weights
    rm_ref  : (4C, 1)    exact per-row pre-bias conv means (from wrapper)
    ssq_ref : (4C, 1)    resident centered sum-of-squares (per parallel core)
    """
    @pl.when(pl.program_id(1) == 0)
    def _init():
        ssq_ref[...] = jnp.zeros_like(ssq_ref)

    taps = _build_taps(xs_ref[...], C, W)                                # (4C, tm)
    conv = jnp.dot(wc_ref[...], taps, preferred_element_type=jnp.float32)
    centered = conv - rm_ref[...]
    # Mask padded tail columns (they would contribute (-rowmean)^2 otherwise).
    blk = pl.program_id(0) * pl.num_programs(1) + pl.program_id(1)
    gcol = blk * tm + lax.broadcasted_iota(jnp.int32, conv.shape, 1)
    centered = jnp.where(gcol < M, centered, jnp.float32(0.0))
    ssq_ref[...] += jnp.sum(centered * centered, axis=1, keepdims=True)


def _fused_kernel(xs_ref, wcs_ref, shift_ref, out_ref, *, C, W):
    """out = LeakyReLU(scale*conv + shift): one MXU matmul + add + select."""
    taps = _build_taps(xs_ref[...], C, W)
    y = jnp.dot(wcs_ref[...], taps, preferred_element_type=jnp.float32) + shift_ref[...]
    out_ref[...] = jnp.where(y >= 0, y, NEG_SLOPE * y)


def _vmem_limit_bytes():
    """min(physical VMEM / 2, 64 MiB): 64 MiB on v5e/v6e, 32 MiB on v7x."""
    cap = 64 * 1024 * 1024
    try:
        info = pltpu.get_tpu_info()
        cap = int(getattr(info, "vmem_capacity_bytes", cap) or cap)
    except Exception:
        pass
    return int(min(cap // 2, 64 * 1024 * 1024))


def _pick_tile_m(M, C, W, vmem_limit):
    """Largest M tile that is a multiple of lcm(128, W), fits the VMEM budget,
    covers no more than M (rounded up), and keeps blocks in the ~0.1-1 MiB range."""
    unit = (128 * W) // math.gcd(128, W)
    cover = pl.cdiv(M, unit) * unit
    per_col = 96 * C                      # rough f32 bytes/column: dbl-buffered IO + temps
    budget = max(unit, ((vmem_limit // 3) // per_col) // unit * unit)
    cap = unit * max(1, 8192 // unit)
    return int(min(cover, budget, cap))


@functools.partial(jax.jit, static_argnames=("tm",))
def upsample_forward(x_nchw, w_t, bias, gamma, beta, *, tm=None):
    """Forward pass matching PyTorch UpSample.forward (training-mode BN)."""
    N, C, H, W = x_nchw.shape
    Ho, Wo = 2 * H, 2 * W
    M = N * H * W                         # input pixels == output pixels per phase
    PC = 4 * C                            # (phase py,px, cout) rows
    f32 = jnp.float32
    vmem_limit = _vmem_limit_bytes()
    if tm is None:
        tm = _pick_tile_m(M, C, W, vmem_limit)
    assert tm % 128 == 0 and tm % W == 0, (tm, W)

    nM = pl.cdiv(M, tm)
    ncore = 2 if (nM >= 2 and PC % 8 == 0) else 1    # megacore split for the stats pass
    nM2 = pl.cdiv(nM, ncore)
    Mp = ncore * nM2 * tm

    # ---- glue: lane-dense x and its +1-row (dy=1) H-shift, stacked on sublanes ----
    x = jnp.transpose(x_nchw, (1, 0, 2, 3)).astype(f32)                 # (C, N, H, W)
    xh = jnp.pad(x, ((0, 0), (0, 0), (0, 1), (0, 0)))[:, :, 1:, :]      # x[.., a+1, .]
    xs = jnp.concatenate([x.reshape(C, M), xh.reshape(C, M)], axis=0)   # (2C, M)
    xs = jnp.pad(xs, ((0, 0), (0, Mp - M)))

    # ---- glue: phase-decomposed ConvTranspose2d weights --------------------------
    #   out[n, co, 2a+py, 2b+px] = sum_{dy,dx,ci} wc[(py,px)*C+co, (dy,dx)*C+ci]
    #                                             * x[n, ci, a+dy, b+dx]
    #   kernel taps ky = py+1-2dy, kx = px+1-2dx (out-of-range -> zero).
    w_t = w_t.astype(f32)                                               # (Cin, Cout, 3, 3)
    zero = jnp.zeros((C, C), f32)
    rows = []
    for py in range(2):
        for px in range(2):
            cols = []
            for dy in range(2):
                for dx in range(2):
                    ky, kx = py + 1 - 2 * dy, px + 1 - 2 * dx
                    cols.append(w_t[:, :, ky, kx].T
                                if (0 <= ky <= 2 and 0 <= kx <= 2) else zero)
            rows.append(jnp.concatenate(cols, axis=1))
    wc = jnp.concatenate(rows, axis=0)                                  # (PC, 4C)

    # ---- glue: exact per-tap-row sums -> per-row / per-channel conv means --------
    s = jnp.concatenate([jnp.sum(x_nchw.astype(f32)[:, :, dy:, dx:], axis=(0, 2, 3))
                         for dy in range(2) for dx in range(2)])        # (4C,)
    rm = (wc @ s) / jnp.asarray(M, f32)             # per (phase, cout) pre-bias mean
    mean_c = jnp.mean(rm.reshape(4, C), axis=0)     # per-channel mean over 4*M outputs

    # ---- pass 1: centered sum-of-squares (two-pass variance, no conv in HBM) -----
    ssq_parts = pl.pallas_call(
        functools.partial(_stats_kernel, C=C, W=W, M=M, tm=tm),
        out_shape=jax.ShapeDtypeStruct((ncore * PC, 1), f32),
        grid=(ncore, nM2),
        in_specs=[pl.BlockSpec((2 * C, tm), lambda p, i, n=nM2: (0, p * n + i)),
                  pl.BlockSpec((PC, 4 * C), lambda p, i: (0, 0)),
                  pl.BlockSpec((PC, 1), lambda p, i: (0, 0))],
        out_specs=pl.BlockSpec((PC, 1), lambda p, i: (p, 0)),
        compiler_params=pltpu.CompilerParams(
            dimension_semantics=("parallel", "arbitrary"),
            vmem_limit_bytes=vmem_limit),
    )(xs, wc, rm.reshape(PC, 1))
    ssq = jnp.sum(ssq_parts.reshape(ncore, 4, C), axis=0)               # (4, C)

    count = jnp.asarray(4 * M, f32)
    var = (jnp.sum(ssq, axis=0)
           + jnp.asarray(M, f32) * jnp.sum((rm.reshape(4, C) - mean_c) ** 2, axis=0)) / count
    scale = gamma.astype(f32) * lax.rsqrt(var + EPS)
    # ConvTranspose2d bias shifts conv and its batch mean identically -> cancels in BN.
    shift = beta.astype(f32) - mean_c * scale
    wcs = wc * jnp.tile(scale, 4)[:, None]                              # BN scale folded in
    shift4 = jnp.tile(shift, 4).reshape(PC, 1)
    # TODO(synk): BatchNorm running_mean/running_var buffer updates (training-time
    # side effect) are not modeled; only the forward normalization is computed.

    # ---- pass 2: fused conv + BN + LeakyReLU, lane-dense output ------------------
    out2d = pl.pallas_call(
        functools.partial(_fused_kernel, C=C, W=W),
        out_shape=jax.ShapeDtypeStruct((PC, Mp), f32),
        grid=(Mp // tm,),
        in_specs=[pl.BlockSpec((2 * C, tm), lambda i: (0, i)),
                  pl.BlockSpec((PC, 4 * C), lambda i: (0, 0)),
                  pl.BlockSpec((PC, 1), lambda i: (0, 0))],
        out_specs=pl.BlockSpec((PC, tm), lambda i: (0, i)),
        compiler_params=pltpu.CompilerParams(
            dimension_semantics=("parallel",),
            vmem_limit_bytes=vmem_limit),
    )(xs, wcs, shift4)

    # ---- glue: (4C, M) -> NCHW pixel shuffle (rows = (py, px, co); cols = (n,a,b)) -
    # TODO(synk): the py/px interleave could be folded into pass 2 (XLU lane
    # interleave) leaving only a contiguous (C,N)->(N,C) copy; left in XLA for now.
    out = out2d[:, :M].reshape(2, 2, C, N, H, W)
    out = out.transpose(3, 2, 4, 0, 5, 1).reshape(N, C, Ho, Wo)
    return out


def reference_forward(x, w_t, bias, gamma, beta):
    """Pure-JAX reference (ConvTranspose2d via lhs-dilated conv + train-mode BN)."""
    w_flip = jnp.flip(w_t, (2, 3)).transpose(1, 0, 2, 3)   # (Cout, Cin, 3, 3)
    y = lax.conv_general_dilated(
        x, w_flip, window_strides=(1, 1), padding=[(1, 2), (1, 2)],
        lhs_dilation=(2, 2), rhs_dilation=(1, 1),
        dimension_numbers=("NCHW", "OIHW", "NCHW"))
    y = y + bias[None, :, None, None]
    mean = jnp.mean(y, axis=(0, 2, 3), keepdims=True)
    var = jnp.mean((y - mean) ** 2, axis=(0, 2, 3), keepdims=True)
    yn = (y - mean) * lax.rsqrt(var + EPS)
    yn = yn * gamma[None, :, None, None] + beta[None, :, None, None]
    return jnp.where(yn >= 0, yn, NEG_SLOPE * yn)


if __name__ == "__main__":
    N, C, H, W = 2, 4, 16, 16
    key = jax.random.PRNGKey(0)
    k_x, k_w, k_b, k_g, k_beta = jax.random.split(key, 5)

    x = jax.random.normal(k_x, (N, C, H, W), jnp.float32)
    # ConvTranspose2d(channel, channel, 3) weight shape: (in_ch, out_ch, 3, 3)
    w_t = jax.random.normal(k_w, (C, C, 3, 3), jnp.float32) * 0.2
    bias = jax.random.normal(k_b, (C,), jnp.float32) * 0.1
    gamma = 1.0 + 0.1 * jax.random.normal(k_g, (C,), jnp.float32)
    beta = 0.1 * jax.random.normal(k_beta, (C,), jnp.float32)

    ref = jax.block_until_ready(reference_forward(x, w_t, bias, gamma, beta))

    # tm=128 : 4 M-tiles -> exercises the 2-way parallel split + stats accumulation
    # tm=384 : 2 M-tiles with a 256-column zero tail -> exercises padded-col masking
    # tm=None: auto-sized single tile (the production path)
    for tile in (128, 384, None):
        out = jax.block_until_ready(upsample_forward(x, w_t, bias, gamma, beta, tm=tile))
        assert out.shape == (N, C, 2 * H, 2 * W), out.shape
        np.testing.assert_allclose(np.asarray(out), np.asarray(ref),
                                   rtol=1e-3, atol=1e-3)
    print("KERNEL_OK")
</pallas_src>

<mosaic_0001>
module attributes {stable_mosaic.version = 11 : i64} {
  func.func @_stats_kernel(%arg0: i32, %arg1: i32, %arg2: memref<8x128xf32, #tpu.memory_space<vmem>>, %arg3: memref<16x16xf32, #tpu.memory_space<vmem>>, %arg4: memref<16x1xf32, #tpu.memory_space<vmem>>, %arg5: memref<16x1xf32, #tpu.memory_space<vmem>>) attributes {dimension_semantics = [#tpu.dimension_semantics<parallel>, #tpu.dimension_semantics<arbitrary>], iteration_bounds = array<i64: 2, 2>, scalar_prefetch = 0 : i64, scratch_operands = 0 : i64, tpu.core_type = #tpu.core_type<tc>, window_params = [{transform_indices = @transform_0, window_bounds = array<i64: 8, 128>}, {pipeline_mode = #tpu.pipeline_mode<synchronous>, transform_indices = @transform_1, window_bounds = array<i64: 16, 16>}, {pipeline_mode = #tpu.pipeline_mode<synchronous>, transform_indices = @transform_2, window_bounds = array<i64: 16, 1>}, {transform_indices = @transform_3, window_bounds = array<i64: 16, 1>}]} {
    %c0_i32 = arith.constant 0 : i32
    %0 = arith.cmpi eq, %arg1, %c0_i32 : i32
    %1 = arith.extui %0 : i1 to i32
    %c0_i32_0 = arith.constant 0 : i32
    %2 = arith.cmpi ne, %1, %c0_i32_0 : i32
    scf.if %2 {
      %cst_18 = arith.constant 0.000000e+00 : f32
      %56 = vector.broadcast %cst_18 : f32 to vector<16x1xf32>
      %c0_19 = arith.constant 0 : index
      %c0_20 = arith.constant 0 : index
      %57 = vector.load %arg5[%c0_19, %c0_20] : memref<16x1xf32, #tpu.memory_space<vmem>>, vector<16x1xf32>
      tpu.vector_store %arg5[%c0_19, %c0_20], %56 {strides = array<i32>} : memref<16x1xf32, #tpu.memory_space<vmem>>, vector<16x1xf32>,
    } else {
    }
    %c0 = arith.constant 0 : index
    %c0_1 = arith.constant 0 : index
    %3 = vector.load %arg2[%c0, %c0_1] : memref<8x128xf32, #tpu.memory_space<vmem>>, vector<8x128xf32>
    %4 = vector.extract_strided_slice %3 {offsets = [0, 1], sizes = [8, 127], strides = [1, 1]} : vector<8x128xf32> to vector<8x127xf32>
    %cst = arith.constant 0.000000e+00 : f32
    %5 = vector.broadcast %cst : f32 to vector<8x1xf32>
    %6 = tpu.concatenate %4, %5 in 1 : vector<8x127xf32>, vector<8x1xf32> -> vector<8x128xf32>
    %7 = tpu.iota {dimensions = array<i32: 1>} : vector<1x128xi32>
    %c16_i32 = arith.constant 16 : i32
    %c0_i32_2 = arith.constant 0 : i32
    %8 = arith.cmpi eq, %c16_i32, %c0_i32_2 : i32
    %c1_i32 = arith.constant 1 : i32
    %9 = arith.select %8, %c1_i32, %c16_i32 : i32
    %10 = vector.broadcast %9 : i32 to vector<1x128xi32>
    %11 = arith.remsi %7, %10 : vector<1x128xi32>
    %c0_i32_3 = arith.constant 0 : i32
    %12 = vector.broadcast %c0_i32_3 : i32 to vector<1x128xi32>
    %13 = arith.cmpi ne, %11, %12 : vector<1x128xi32>
    %c0_i32_4 = arith.constant 0 : i32
    %14 = vector.broadcast %c0_i32_4 : i32 to vector<1x128xi32>
    %15 = arith.cmpi slt, %11, %14 : vector<1x128xi32>
    %c0_i32_5 = arith.constant 0 : i32
    %16 = arith.cmpi slt, %9, %c0_i32_5 : i32
    %17 = vector.broadcast %16 : i1 to vector<1x128xi1>
    %18 = vector.broadcast %17 : vector<1x128xi1> to vector<1x128xi1>
    %19 = arith.xori %15, %18 : vector<1x128xi1>
    %20 = arith.andi %19, %13 : vector<1x128xi1>
    %21 = vector.broadcast %9 : i32 to vector<1x128xi32>
    %22 = arith.addi %11, %21 : vector<1x128xi32>
    %23 = arith.select %20, %22, %11 : vector<1x128xi1>, vector<1x128xi32>
    %c15_i32 = arith.constant 15 : i32
    %24 = vector.broadcast %c15_i32 : i32 to vector<1x128xi32>
    %25 = arith.cmpi eq, %23, %24 : vector<1x128xi32>
    %cst_6 = arith.constant 0.000000e+00 : f32
    %26 = vector.shape_cast %25 : vector<1x128xi1> to vector<1x128xi1>
    %27 = vector.broadcast %26 : vector<1x128xi1> to vector<8x128xi1>
    %28 = vector.broadcast %cst_6 : f32 to vector<8x128xf32>
    %29 = arith.select %27, %28, %6 : vector<8x128xi1>, vector<8x128xf32>
    %30 = vector.extract_strided_slice %3 {offsets = [0, 0], sizes = [4, 128], strides = [1, 1]} : vector<8x128xf32> to vector<4x128xf32>
    %31 = vector.extract_strided_slice %29 {offsets = [0, 0], sizes = [4, 128], strides = [1, 1]} : vector<8x128xf32> to vector<4x128xf32>
    %32 = vector.extract_strided_slice %3 {offsets = [4, 0], sizes = [4, 128], strides = [1, 1]} : vector<8x128xf32> to vector<4x128xf32>
    %33 = vector.extract_strided_slice %29 {offsets = [4, 0], sizes = [4, 128], strides = [1, 1]} : vector<8x128xf32> to vector<4x128xf32>
    %34 = tpu.concatenate %30, %31, %32, %33 in 0 : vector<4x128xf32>, vector<4x128xf32>, vector<4x128xf32>, vector<4x128xf32> -> vector<16x128xf32>
    %c0_7 = arith.constant 0 : index
    %c0_8 = arith.constant 0 : index
    %35 = vector.load %arg3[%c0_7, %c0_8] : memref<16x16xf32, #tpu.memory_space<vmem>>, vector<16x16xf32>
    %cst_9 = arith.constant dense<0.000000e+00> : vector<16x128xf32>
    %36 = tpu.matmul %35, %34, %cst_9 {dimension_numbers = #tpu.dot_dimension_numbers<[1], [0], [0], [1], [0, 0, 1, 1], [], []>} : vector<16x16xf32>, vector<16x128xf32>, vector<16x128xf32> -> vector<16x128xf32>
    %c0_10 = arith.constant 0 : index
    %c0_11 = arith.constant 0 : index
    %37 = vector.load %arg4[%c0_10, %c0_11] : memref<16x1xf32, #tpu.memory_space<vmem>>, vector<16x1xf32>
    %38 = vector.broadcast %37 : vector<16x1xf32> to vector<16x128xf32>
    %39 = arith.subf %36, %38 : vector<16x128xf32>
    %c2_i32 = arith.constant 2 : i32
    %40 = arith.muli %arg0, %c2_i32 : i32
    %41 = arith.addi %40, %arg1 : i32
    %c128_i32 = arith.constant 128 : i32
    %42 = arith.muli %41, %c128_i32 : i32
    %43 = tpu.iota {dimensions = array<i32: 1>} : vector<16x128xi32>
    %44 = vector.broadcast %42 : i32 to vector<16x128xi32>
    %45 = arith.addi %44, %43 : vector<16x128xi32>
    %c512_i32 = arith.constant 512 : i32
    %46 = vector.broadcast %c512_i32 : i32 to vector<16x128xi32>
    %47 = arith.cmpi slt, %45, %46 : vector<16x128xi32>
    %cst_12 = arith.constant 0.000000e+00 : f32
    %48 = vector.broadcast %cst_12 : f32 to vector<16x128xf32>
    %49 = arith.select %47, %39, %48 : vector<16x128xi1>, vector<16x128xf32>
    %c0_13 = arith.constant 0 : index
    %c0_14 = arith.constant 0 : index
    %50 = vector.load %arg5[%c0_13, %c0_14] : memref<16x1xf32, #tpu.memory_space<vmem>>, vector<16x1xf32>
    %51 = arith.mulf %49, %49 : vector<16x128xf32>
    %cst_15 = arith.constant dense<0.000000e+00> : vector<16xf32>
    %52 = vector.multi_reduction <add>, %51, %cst_15 [1] : vector<16x128xf32> to vector<16xf32>
    %53 = vector.shape_cast %52 : vector<16xf32> to vector<16x1xf32>
    %54 = arith.addf %50, %53 : vector<16x1xf32>
    %c0_16 = arith.constant 0 : index
    %c0_17 = arith.constant 0 : index
    %55 = vector.load %arg5[%c0_16, %c0_17] : memref<16x1xf32, #tpu.memory_space<vmem>>, vector<16x1xf32>
    tpu.vector_store %arg5[%c0_16, %c0_17], %54 {strides = array<i32>} : memref<16x1xf32, #tpu.memory_space<vmem>>, vector<16x1xf32>,
    return
  }
  func.func @transform_0(%arg0: i32, %arg1: i32) -> (i32, i32) {
    %c2_i32 = arith.constant 2 : i32
    %0 = arith.muli %arg0, %c2_i32 : i32
    %1 = arith.addi %0, %arg1 : i32
    %c0_i32 = arith.constant 0 : i32
    %c0_i32_0 = arith.constant 0 : i32
    return %c0_i32, %1 : i32, i32
  }
  func.func @transform_1(%arg0: i32, %arg1: i32) -> (i32, i32) {
    %c0_i32 = arith.constant 0 : i32
    %c0_i32_0 = arith.constant 0 : i32
    %c0_i32_1 = arith.constant 0 : i32
    return %c0_i32, %c0_i32_0 : i32, i32
  }
  func.func @transform_2(%arg0: i32, %arg1: i32) -> (i32, i32) {
    %c0_i32 = arith.constant 0 : i32
    %c0_i32_0 = arith.constant 0 : i32
    %c0_i32_1 = arith.constant 0 : i32
    return %c0_i32, %c0_i32_0 : i32, i32
  }
  func.func @transform_3(%arg0: i32, %arg1: i32) -> (i32, i32) {
    %c0_i32 = arith.constant 0 : i32
    %c0_i32_0 = arith.constant 0 : i32
    return %arg0, %c0_i32 : i32, i32
  }
}

module attributes {stable_mosaic.version = 11 : i64} {
  func.func @_fused_kernel(%arg0: i32, %arg1: memref<8x128xf32, #tpu.memory_space<vmem>>, %arg2: memref<16x16xf32, #tpu.memory_space<vmem>>, %arg3: memref<16x1xf32, #tpu.memory_space<vmem>>, %arg4: memref<16x128xf32, #tpu.memory_space<vmem>>) attributes {dimension_semantics = [#tpu.dimension_semantics<parallel>], iteration_bounds = array<i64: 4>, scalar_prefetch = 0 : i64, scratch_operands = 0 : i64, tpu.core_type = #tpu.core_type<tc>, window_params = [{transform_indices = @transform_0, window_bounds = array<i64: 8, 128>}, {pipeline_mode = #tpu.pipeline_mode<synchronous>, transform_indices = @transform_1, window_bounds = array<i64: 16, 16>}, {pipeline_mode = #tpu.pipeline_mode<synchronous>, transform_indices = @transform_2, window_bounds = array<i64: 16, 1>}, {transform_indices = @transform_3, window_bounds = array<i64: 16, 128>}]} {
    %c0 = arith.constant 0 : index
    %c0_0 = arith.constant 0 : index
    %0 = vector.load %arg1[%c0, %c0_0] : memref<8x128xf32, #tpu.memory_space<vmem>>, vector<8x128xf32>
    %1 = vector.extract_strided_slice %0 {offsets = [0, 1], sizes = [8, 127], strides = [1, 1]} : vector<8x128xf32> to vector<8x127xf32>
    %cst = arith.constant 0.000000e+00 : f32
    %2 = vector.broadcast %cst : f32 to vector<8x1xf32>
    %3 = tpu.concatenate %1, %2 in 1 : vector<8x127xf32>, vector<8x1xf32> -> vector<8x128xf32>
    %4 = tpu.iota {dimensions = array<i32: 1>} : vector<1x128xi32>
    %c16_i32 = arith.constant 16 : i32
    %c0_i32 = arith.constant 0 : i32
    %5 = arith.cmpi eq, %c16_i32, %c0_i32 : i32
    %c1_i32 = arith.constant 1 : i32
    %6 = arith.select %5, %c1_i32, %c16_i32 : i32
    %7 = vector.broadcast %6 : i32 to vector<1x128xi32>
    %8 = arith.remsi %4, %7 : vector<1x128xi32>
    %c0_i32_1 = arith.constant 0 : i32
    %9 = vector.broadcast %c0_i32_1 : i32 to vector<1x128xi32>
    %10 = arith.cmpi ne, %8, %9 : vector<1x128xi32>
    %c0_i32_2 = arith.constant 0 : i32
    %11 = vector.broadcast %c0_i32_2 : i32 to vector<1x128xi32>
    %12 = arith.cmpi slt, %8, %11 : vector<1x128xi32>
    %c0_i32_3 = arith.constant 0 : i32
    %13 = arith.cmpi slt, %6, %c0_i32_3 : i32
    %14 = vector.broadcast %13 : i1 to vector<1x128xi1>
    %15 = vector.broadcast %14 : vector<1x128xi1> to vector<1x128xi1>
    %16 = arith.xori %12, %15 : vector<1x128xi1>
    %17 = arith.andi %16, %10 : vector<1x128xi1>
    %18 = vector.broadcast %6 : i32 to vector<1x128xi32>
    %19 = arith.addi %8, %18 : vector<1x128xi32>
    %20 = arith.select %17, %19, %8 : vector<1x128xi1>, vector<1x128xi32>
    %c15_i32 = arith.constant 15 : i32
    %21 = vector.broadcast %c15_i32 : i32 to vector<1x128xi32>
    %22 = arith.cmpi eq, %20, %21 : vector<1x128xi32>
    %cst_4 = arith.constant 0.000000e+00 : f32
    %23 = vector.shape_cast %22 : vector<1x128xi1> to vector<1x128xi1>
    %24 = vector.broadcast %23 : vector<1x128xi1> to vector<8x128xi1>
    %25 = vector.broadcast %cst_4 : f32 to vector<8x128xf32>
    %26 = arith.select %24, %25, %3 : vector<8x128xi1>, vector<8x128xf32>
    %27 = vector.extract_strided_slice %0 {offsets = [0, 0], sizes = [4, 128], strides = [1, 1]} : vector<8x128xf32> to vector<4x128xf32>
    %28 = vector.extract_strided_slice %26 {offsets = [0, 0], sizes = [4, 128], strides = [1, 1]} : vector<8x128xf32> to vector<4x128xf32>
    %29 = vector.extract_strided_slice %0 {offsets = [4, 0], sizes = [4, 128], strides = [1, 1]} : vector<8x128xf32> to vector<4x128xf32>
    %30 = vector.extract_strided_slice %26 {offsets = [4, 0], sizes = [4, 128], strides = [1, 1]} : vector<8x128xf32> to vector<4x128xf32>
    %31 = tpu.concatenate %27, %28, %29, %30 in 0 : vector<4x128xf32>, vector<4x128xf32>, vector<4x128xf32>, vector<4x128xf32> -> vector<16x128xf32>
    %c0_5 = arith.constant 0 : index
    %c0_6 = arith.constant 0 : index
    %32 = vector.load %arg2[%c0_5, %c0_6] : memref<16x16xf32, #tpu.memory_space<vmem>>, vector<16x16xf32>
    %cst_7 = arith.constant dense<0.000000e+00> : vector<16x128xf32>
    %33 = tpu.matmul %32, %31, %cst_7 {dimension_numbers = #tpu.dot_dimension_numbers<[1], [0], [0], [1], [0, 0, 1, 1], [], []>} : vector<16x16xf32>, vector<16x128xf32>, vector<16x128xf32> -> vector<16x128xf32>
    %c0_8 = arith.constant 0 : index
    %c0_9 = arith.constant 0 : index
    %34 = vector.load %arg3[%c0_8, %c0_9] : memref<16x1xf32, #tpu.memory_space<vmem>>, vector<16x1xf32>
    %35 = vector.broadcast %34 : vector<16x1xf32> to vector<16x128xf32>
    %36 = arith.addf %33, %35 : vector<16x128xf32>
    %cst_10 = arith.constant 0.000000e+00 : f32
    %37 = vector.broadcast %cst_10 : f32 to vector<16x128xf32>
    %38 = arith.cmpf oge, %36, %37 : vector<16x128xf32>
    %cst_11 = arith.constant 0.00999999977 : f32
    %39 = vector.broadcast %cst_11 : f32 to vector<16x128xf32>
    %40 = arith.mulf %39, %36 : vector<16x128xf32>
    %41 = arith.select %38, %36, %40 : vector<16x128xi1>, vector<16x128xf32>
    %c0_12 = arith.constant 0 : index
    %c0_13 = arith.constant 0 : index
    %42 = vector.load %arg4[%c0_12, %c0_13] : memref<16x128xf32, #tpu.memory_space<vmem>>, vector<16x128xf32>
    tpu.vector_store %arg4[%c0_12, %c0_13], %41 {strides = array<i32>} : memref<16x128xf32, #tpu.memory_space<vmem>>, vector<16x128xf32>,
    return
  }
  func.func @transform_0(%arg0: i32) -> (i32, i32) {
    %c0_i32 = arith.constant 0 : i32
    %c0_i32_0 = arith.constant 0 : i32
    return %c0_i32, %arg0 : i32, i32
  }
  func.func @transform_1(%arg0: i32) -> (i32, i32) {
    %c0_i32 = arith.constant 0 : i32
    %c0_i32_0 = arith.constant 0 : i32
    %c0_i32_1 = arith.constant 0 : i32
    return %c0_i32, %c0_i32_0 : i32, i32
  }
  func.func @transform_2(%arg0: i32) -> (i32, i32) {
    %c0_i32 = arith.constant 0 : i32
    %c0_i32_0 = arith.constant 0 : i32
    %c0_i32_1 = arith.constant 0 : i32
    return %c0_i32, %c0_i32_0 : i32, i32
  }
  func.func @transform_3(%arg0: i32) -> (i32, i32) {
    %c0_i32 = arith.constant 0 : i32
    %c0_i32_0 = arith.constant 0 : i32
    return %c0_i32, %arg0 : i32, i32
  }
}

</mosaic_0001>

<llo_original>
// kernel: tile.18
$region0: #{tile.18}
  #allocation0 [shape = 's32[1]{0}', space=sflag, size = 0x4, scoped, tag = 'scoped memory for tile.18']
  %s0 = inlined_call_operand.vmem [shape: f32[4], index: 0, kind: input, shape index: {}]
  %s1 = inlined_call_operand.vmem [shape: f32[4,4], index: 1, kind: output, shape index: {}]
  // Predicated region
  $region2: #{tile.18} parent=0 // pred_check
    _
  $region3: #{tile.18} parent=0 // pred_check_branch
    %3 = sbr.rel (0) target = $region5
  $region4: #{tile.18} parent=0 // pred_region
    _
  $region5: #{tile.18} parent=0 // pred_fallthru
    _
  %v4 = vld [vmem:[%s0] ss:$0 sm:$0xff]
  %5 = vst [vmem:[%s1] sm:$0xf] %v4

// kernel: mul.11
$region0: #{mul.11}
  %s0 = inlined_call_operand.vmem [shape: f32[4,4], index: 0, kind: input, shape index: {}]
  %s1 = inlined_call_operand.vmem [shape: f32[16], index: 1, kind: output, shape index: {}]
  $region1: #{mul.11} parent=0
    #allocation0 [shape = 'u8[4096]{0}', space=vmem, size = 0x1000, scoped, tag = 'scoped mem for output reshape']
    #allocation1 [shape = 'u8[4096]{0}', space=vmem, size = 0x1000, scoped, tag = 'scoped mem for input reshape']
    %s3 = ssub.s32 16, 1
    %v4 = vld [vmem:[%s0] sm:%s3]
    %5 = vst [vmem:[#allocation1] sm:%s3] %v4
    %v6 = vld [vmem:[#allocation1] sm:$0x1]
    %vm7 = vcmask 31744
    %8 = vst.msk [vmem:[#allocation0] sm:$0x1] %vm7, %v6
    %s9 = scalar_lea.vmem [#allocation1], 3
    %v10 = vld [vmem:[%s9] sm:$0x1]
    %11 = vrot.lane.b32.xlu0 %v10, 12
    %v12 = vpop.permute.xlu0 %11
    %vm13 = vcmask 130144
    %14 = vst.msk [vmem:[#allocation0] sm:$0x1] %vm13, %v12
    %s15 = scalar_lea.vmem [#allocation1], 2
    %v16 = vld [vmem:[%s15] sm:$0x1]
    %17 = vrot.lane.b32.xlu0 %v16, 8
    %v18 = vpop.permute.xlu0 %17
    %vm19 = vcmask 97344
    %20 = vst.msk [vmem:[#allocation0] sm:$0x1] %vm19, %v18
    %s21 = scalar_lea.vmem [#allocation1], 1
    %v22 = vld [vmem:[%s21] sm:$0x1]
    %23 = vrot.lane.b32.xlu0 %v22, 4
    %v24 = vpop.permute.xlu0 %23
    %vm25 = vcmask 64544
    %26 = vst.msk [vmem:[#allocation0] sm:$0x1] %vm25, %v24
    %s28 = ssub.s32 2, 1
    %v29 = vld [vmem:[#allocation0] sm:%s28]
    %s31 = ssub.s32 2, 1
    %32 = vst [vmem:[%s1] sm:%s31] %v29

// kernel: tile.0
$region0: #{tile.0}
  %s0 = inlined_call_operand.vmem [shape: f32[4,4], index: 0, kind: input, shape index: {}]
  %s1 = inlined_call_operand.vmem [shape: f32[16,1], index: 1, kind: output, shape index: {}]
  $region1: #{tile.0} parent=0
    #allocation0 [shape = 'u8[4096]{0}', space=vmem, size = 0x1000, scoped, tag = 'scoped mem for input reshape']
    %s3 = ssub.s32 16, 1
    %v4 = vld [vmem:[%s0] sm:%s3]
    %5 = vst [vmem:[#allocation0] sm:%s3] %v4
    %v6 = vld [vmem:[#allocation0] sm:$0xf]
    %vm7 = vcmask 7168
    %8 = vst.msk [vmem:[%s1] ss:$4 sm:$0xf] %vm7, %v6
    %v9 = vld [vmem:[#allocation0] sm:$0xf]
    %10 = vrot.lane.b32.xlu0 %v9, 127
    %v11 = vpop.permute.xlu0 %10
    %vm12 = vcmask 7168
    %s13 = scalar_lea.vmem %s1, 1
    %14 = vst.msk [vmem:[%s13] ss:$4 sm:$0xf] %vm12, %v11
    %v15 = vld [vmem:[#allocation0] sm:$0xf]
    %16 = vrot.lane.b32.xlu0 %v15, 126
    %v17 = vpop.permute.xlu0 %16
    %vm18 = vcmask 7168
    %s19 = scalar_lea.vmem %s1, 2
    %20 = vst.msk [vmem:[%s19] ss:$4 sm:$0xf] %vm18, %v17
    %v21 = vld [vmem:[#allocation0] sm:$0xf]
    %22 = vrot.lane.b32.xlu0 %v21, 125
    %v23 = vpop.permute.xlu0 %22
    %vm24 = vcmask 7168
    %s25 = scalar_lea.vmem %s1, 3
    %26 = vst.msk [vmem:[%s25] ss:$4 sm:$0xf] %vm24, %v23

// kernel: upsample_forward.2
$region0: #{upsample_forward.2}
  #allocation0 [shape = 'u32[]', space=smem, size = 0x4, offset = 0x4, fixed_abs, tag = 'smem constant byte address 0x4 - core index']
  #allocation1 [shape = 'u32[72,128]{1,0:T(1,128)}', space=vmem, size = 0x9000, scoped, tag = 'internal scratch']
  %s0 = inlined_call_operand.vmem [shape: f32[8,512], index: 0, kind: input, shape index: {}]
  %s1 = inlined_call_operand.vmem [shape: f32[16,16], index: 1, kind: input, shape index: {}]
  %s2 = inlined_call_operand.vmem [shape: f32[16,1], index: 2, kind: input, shape index: {}]
  %s3 = inlined_call_operand.vmem [shape: f32[32,1], index: 3, kind: output, shape index: {}]
  %s4 = sld [smem:[#allocation0]]
  $region49: #{upsample_forward.2} parent=0
    _
  %s6 = ssub.s32 1, %s4
  %s7 = scalar_select 0, %s6, %s4
  loop: start=0, step=1, limit=6
  $region2: #{upsample_forward.2} parent=0 // loop_pre_header
    _
  $region3: #{upsample_forward.2} parent=0 // loop_header
    %s9 = sphi 0, %s13
    %p10 = scmp.ge.s32.totalorder %s9, 6
    %s16 = sphi 0, %s28
    %s17 = sphi 0, %s24
    %s18 = sphi 0, %s16
    %s19 = sphi 0, %s17
    %s20 = sphi 0, %s18
    %s21 = sphi 0, %s19
    %s35 = sphi 0, %s37
    %s38 = sphi 0, %s35
    %s39 = sphi 0, %s38
    %s55 = sphi 0, %s39
    %s59 = sphi 0, %s59
    %s61 = sphi 0, %s59
    %s62 = sphi 0, %s61
    %s76 = sphi 0, %s62
    %s80 = sphi 0, %s80
    %s82 = sphi 0, %s80
    %s83 = sphi 0, %s82
    %s97 = sphi 0, %s83
    %s103 = sphi 0, %s105
    %s106 = sphi 0, %s103
    %s107 = sphi 0, %s106
    %s123 = sphi 0, %s107
  $region4: #{upsample_forward.2} parent=0 // loop_header_branch
    %12 = sbr.rel (%p10) target = $region8
  $region5: #{upsample_forward.2} parent=0 // loop_body
    %s14 = ssub.s32 %s9, 1
    %s15 = ssub.s32 %s9, 2
    %s22 = sadd.s32 1, %s17
    %p23 = scmp.ge.s32.totalorder %s22, 2
    %s24 = scalar_select %p23, 0, %s22
    %s25 = sadd.s32 1, %s16
    %s26 = scalar_select %p23, %s25, %s16
    %p27 = scmp.ge.s32.totalorder %s26, 2
    %s28 = scalar_select %p27, 0, %s26
    %s29 = smul.u32 %s16, 2
    %s30 = sadd.s32 %s29, %s17
    %s31 = smul.u32 %s28, 2
    %s32 = sadd.s32 %s31, %s24
    %s33 = ssub.s32 %s30, %s32
    %p34 = scmp.eq.s32.totalorder %s33, 0
    %s36 = sadd.s32 %s35, 1
    %s37 = scalar_select %p34, %s35, %s36
    %p40 = pneg %p34
    %p41 = scmp.eq.s32.totalorder %s9, 3
    %p42 = por %p40, %p41
    %p43 = scmp.ne.s32.totalorder %s35, %s38
    %p44 = scmp.eq.s32.totalorder %s9, 0
    %p45 = por %p43, %p44
    %p46 = scmp.ne.s32.totalorder %s35, %s38
    %p47 = scmp.eq.s32.totalorder %s14, 3
    %p48 = por %p46, %p47
    %p49 = scmp.ne.s32.totalorder %s38, %s39
    %p50 = scmp.eq.s32.totalorder %s14, 0
    %p51 = por %p49, %p50
    %p52 = scmp.ne.s32.totalorder %s38, %s39
    %p53 = scmp.eq.s32.totalorder %s15, 3
    %p54 = por %p52, %p53
    %p56 = scmp.ne.s32.totalorder %s39, %s55
    %p57 = scmp.eq.s32.totalorder %s15, 0
    %p58 = por %p56, %p57
    %s60 = sadd.s32 %s59, 1
    %p63 = scmp.eq.s32.totalorder %s9, 3
    %p64 = scmp.ne.s32.totalorder %s59, %s61
    %p65 = scmp.eq.s32.totalorder %s9, 0
    %p66 = por %p64, %p65
    %p67 = scmp.ne.s32.totalorder %s59, %s61
    %p68 = scmp.eq.s32.totalorder %s14, 3
    %p69 = por %p67, %p68
    %p70 = scmp.ne.s32.totalorder %s61, %s62
    %p71 = scmp.eq.s32.totalorder %s14, 0
    %p72 = por %p70, %p71
    %p73 = scmp.ne.s32.totalorder %s61, %s62
    %p74 = scmp.eq.s32.totalorder %s15, 3
    %p75 = por %p73, %p74
    %p77 = scmp.ne.s32.totalorder %s62, %s76
    %p78 = scmp.eq.s32.totalorder %s15, 0
    %p79 = por %p77, %p78
    %s81 = sadd.s32 %s80, 1
    %p84 = scmp.eq.s32.totalorder %s9, 3
    %p85 = scmp.ne.s32.totalorder %s80, %s82
    %p86 = scmp.eq.s32.totalorder %s9, 0
    %p87 = por %p85, %p86
    %p88 = scmp.ne.s32.totalorder %s80, %s82
    %p89 = scmp.eq.s32.totalorder %s14, 3
    %p90 = por %p88, %p89
    %p91 = scmp.ne.s32.totalorder %s82, %s83
    %p92 = scmp.eq.s32.totalorder %s14, 0
    %p93 = por %p91, %p92
    %p94 = scmp.ne.s32.totalorder %s82, %s83
    %p95 = scmp.eq.s32.totalorder %s15, 3
    %p96 = por %p94, %p95
    %p98 = scmp.ne.s32.totalorder %s83, %s97
    %p99 = scmp.eq.s32.totalorder %s15, 0
    %p100 = por %p98, %p99
    %s101 = ssub.s32 %s16, %s28
    %p102 = scmp.eq.s32.totalorder %s101, 0
    %s104 = sadd.s32 %s103, 1
    %s105 = scalar_select %p102, %s103, %s104
    %p108 = pneg %p102
    %p109 = scmp.eq.s32.totalorder %s9, 3
    %p110 = por %p108, %p109
    %p111 = scmp.ne.s32.totalorder %s103, %s106
    %p112 = scmp.eq.s32.totalorder %s9, 0
    %p113 = por %p111, %p112
    %p114 = scmp.ne.s32.totalorder %s103, %s106
    %p115 = scmp.eq.s32.totalorder %s14, 3
    %p116 = por %p114, %p115
    %p117 = scmp.ne.s32.totalorder %s106, %s107
    %p118 = scmp.eq.s32.totalorder %s14, 0
    %p119 = por %p117, %p118
    %p120 = scmp.ne.s32.totalorder %s106, %s107
    %p121 = scmp.eq.s32.totalorder %s15, 3
    %p122 = por %p120, %p121
    %p124 = scmp.ne.s32.totalorder %s107, %s123
    %p125 = scmp.eq.s32.totalorder %s15, 0
    %p126 = por %p124, %p125
    %p127 = scmp.le.s32.totalorder 1, %s9
    %p128 = scmp.lt.s32.totalorder %s9, 5
    %p129 = pnand %p127, %p128
    %p130 = pneg %p129
    // Predicated region
    $region9: #{upsample_forward.2} parent=5 // pred_check
      _
    $region10: #{upsample_forward.2} parent=5 // pred_check_branch
      %132 = sbr.rel (%p129) target = $region12
    $region11: #{upsample_forward.2} parent=5 // pred_region
      %s133 = ssub.s32 %s9, 1
      // Predicated region
      $region13: #{upsample_forward.2} parent=11 // pred_check
        %p134 = pneg %p72
      $region14: #{upsample_forward.2} parent=11 // pred_check_branch
        %136 = sbr.rel (%p134) target = $region16
      $region15: #{upsample_forward.2} parent=11 // pred_region
        _
      $region16: #{upsample_forward.2} parent=11 // pred_fallthru
        _
      // Predicated region
      $region17: #{upsample_forward.2} parent=11 // pred_check
        %p137 = pneg %p93
      $region18: #{upsample_forward.2} parent=11 // pred_check_branch
        %139 = sbr.rel (%p137) target = $region20
      $region19: #{upsample_forward.2} parent=11 // pred_region
        _
      $region20: #{upsample_forward.2} parent=11 // pred_fallthru
        _
    $region12: #{upsample_forward.2} parent=5 // pred_fallthru
      _
    %p140 = scmp.lt.s32.totalorder %s9, 4
    // Predicated region
    $region21: #{upsample_forward.2} parent=5 // pred_check
      %p141 = pneg %p140
    $region22: #{upsample_forward.2} parent=5 // pred_check_branch
      %143 = sbr.rel (%p141) target = $region24
    $region23: #{upsample_forward.2} parent=5 // pred_region
      // Predicated region
      $region25: #{upsample_forward.2} parent=23 // pred_check
        %p144 = pneg %p45
      $region26: #{upsample_forward.2} parent=23 // pred_check_branch
        %146 = sbr.rel (%p144) target = $region28
      $region27: #{upsample_forward.2} parent=23 // pred_region
        %s147 = smul.u32 %s16, 2
        %s148 = sadd.s32 %s147, %s17
        %p149 = scmp.lt.s32.totalorder %s148, 3
        %s150 = scalar_select %p149, %s148, 3
        %s151 = smul.addr %s150, 8
        %s152 = scalar_lea.vmem %s0, %s151
        %s153 = smul.u32 %s16, 2
        %s154 = sadd.s32 %s153, %s17
      $region28: #{upsample_forward.2} parent=23 // pred_fallthru
        _
    $region24: #{upsample_forward.2} parent=5 // pred_fallthru
      _
    %p155 = scmp.le.s32.totalorder 1, %s9
    %p156 = scmp.lt.s32.totalorder %s9, 5
    %p157 = pnand %p155, %p156
    %p158 = pneg %p157
    // Predicated region
    $region29: #{upsample_forward.2} parent=5 // pred_check
      _
    $region30: #{upsample_forward.2} parent=5 // pred_check_branch
      %160 = sbr.rel (%p157) target = $region32
    $region31: #{upsample_forward.2} parent=5 // pred_region
      %s161 = ssub.s32 %s9, 1
      %s162 = smul.u32 %s18, 2
      %s163 = sadd.s32 %s162, %s19
      %p164 = scmp.lt.s32.totalorder %s163, 3
      %s165 = scalar_select %p164, %s163, 3
      %s166 = smul.addr %s165, 8
      %s167 = scalar_lea.vmem %s0, %s166
      %p168 = pneg %p51
      %p169 = pneg %p48
      %p170 = pneg %p72
      %p171 = pneg %p69
      %p172 = pneg %p93
      %p173 = pneg %p90
      %p174 = pneg %p119
      %p175 = pneg %p116
      %s176 = smul.u32 2, %s18
      %p177 = scmp.lt.s32.totalorder %s176, 3
      %s178 = scalar_select %p177, %s176, 3
      %s179 = smul.addr %s178, 8
      %s180 = scalar_lea.vmem %s3, %s179
      %s181 = smul.u32 %s18, 2
      %s182 = sadd.s32 %s181, %s19
      %p183 = scmp.lt.s32.totalorder %s182, 3
      %s184 = scalar_select %p183, %s182, 3
      %s185 = smul.addr %s184, 8
      %s186 = scalar_lea.vmem %s0, %s185
      %s187 = smul.u32 %s18, 2
      %s188 = sadd.s32 %s187, %s19
      %s189 = smul.u32 2, %s18
      %p190 = scmp.lt.s32.totalorder %s189, 3
      %s191 = scalar_select %p190, %s189, 3
      %s192 = smul.addr %s191, 8
      %s193 = scalar_lea.vmem %s3, %s192
      %s194 = smul.u32 2, %s18
      %p195 = scmp.eq.s32.totalorder %s19, 0
      // Predicated region
      $region33: #{upsample_forward.2} parent=31 // pred_check
        %p196 = pneg %p195
      $region34: #{upsample_forward.2} parent=31 // pred_check_branch
        %198 = sbr.rel (%p196) target = $region36
      $region35: #{upsample_forward.2} parent=31 // pred_region
        %vm199 = vcmask 7168
        %200 = vst.msk [vmem:[%s193] sm:$0xff] %vm199, 0.0
        %201 = vst.msk [vmem:[%s193 + $0x8] sm:$0xff] %vm199, 0.0
      $region36: #{upsample_forward.2} parent=31 // pred_fallthru
        _
      %v202 = vld [vmem:[%s186] sm:$0xff]
      %204 = vrot.lane.b32.xlu0 %v202, 127
      %v205 = vpop.permute.xlu0 %204
      %vm207 = vcmask 1039360
      %v208 = vsel %vm207, %v205, 0.0
      %v209 = vlaneseq
      %v210 = vand.u32 %v209, 127
      %vm211 = vcmp.lt.s32.totalorder %v210, 0
      %v212 = vsub.s32 0, %v210
      %v213 = vsel %vm211, %v212, %v210
      %v214 = vshrl.u32 %v213, 4
      %v215 = vand.u32 %v213, 15
      %v216 = vsub.s32 0, %v215
      %v217 = vsel %vm211, %v216, %v215
      %vm218 = vcmp.ne.s32.totalorder %v217, 0
      %vm219 = vcmp.lt.s32.totalorder %v217, 0
      %vm220 = vmand %vm219, %vm218
      %v221 = vadd.s32 %v217, 16
      %v222 = vsel %vm220, %v221, %v217
      %vm223 = vcmp.eq.s32.totalorder %v222, 15
      %v224 = vsel %vm223, 1, 0
      %vm225 = vcmp.eq.s32.totalorder %v224, 1
      %v226 = vsel %vm225, 0.0, %v208
      %v228 = vrot.slane %v226, 4
      %v230 = vrot.slane %v202, 4
      %vm232 = vcmask 1043456
      %v233 = vsel %vm232, %v202, %v228
      %v234 = vsel %vm232, %v230, %v226
      %v235 = vld [vmem:[%s1] sm:$0xff]
      %v236 = vld [vmem:[%s1 + $0x8] sm:$0xff]
      %vm237 = vcmask 130048
      %v239 = vsel %vm237, %v235, 0
      %v242 = vsel %vm237, %v236, 0
      %244 = vmatpush.msra.mxu0 0.0
      %245 = vmatpush.msra.mxu0 0.0
      %246 = vmatpush.msra.mxu0 0.0
      %247 = vmatpush.msra.mxu0 0.0
      %248 = vmatpush.msra.mxu0 0.0
      %249 = vmatpush.msra.mxu0 0.0
      %250 = vmatpush.msra.mxu0 0.0
      %251 = vmatpush.msra.mxu0 0.0
      %252 = vmatpush.msra.mxu0 0.0
      %253 = vmatpush.msra.mxu0 0.0
      %254 = vmatpush.msra.mxu0 0.0
      %255 = vmatpush.msra.mxu0 0.0
      %256 = vmatpush.msra.mxu0 0.0
      %257 = vmatpush.msra.mxu0 0.0
      %258 = vmatpush.msra.mxu0 %v234
      %259 = vmatpush.msra.mxu0 %v233
      %260 = vmatmul.f32.gmra.mxu0 %v239
      %v261 = vpop.f32.mrf.mxu0
      %v262 = vadd.f32 0.0, %v261
      %263 = vmatmul.f32.gmra.mxu0 %v242
      %v264 = vpop.f32.mrf.mxu0
      %v265 = vadd.f32 0.0, %v264
      %266 = vdwg.mxu0
      %v267 = vld [vmem:[%s2] sm:$0xff]
      %v268 = vld [vmem:[%s2 + $0x8] sm:$0xff]
      %270 = vset.pattern.permute.xlu0 0
      %271 = vperm.xlu0 %270, %v267
      %v272 = vpop.permute.xlu0 %271
      %275 = vset.pattern.permute.xlu0 0
      %276 = vperm.xlu0 %275, %v268
      %v277 = vpop.permute.xlu0 %276
      %v279 = vsub.f32 %v262, %v272
      %v280 = vsub.f32 %v265, %v277
      %s281 = smul.u32 %s18, 2
      %s282 = sadd.s32 %s281, %s19
      %s283 = smul.u32 %s282, 128
      %v284 = vstv %s283
      %v285 = vadd.s32 %v284, %v210
      %vm286 = vcmp.lt.s32.totalorder %v285, 512
      %v287 = vsel %vm286, %v279, 0.0
      %v288 = vsel %vm286, %v280, 0.0
      %v289 = vld [vmem:[%s193] sm:$0xff]
      %v290 = vld [vmem:[%s193 + $0x8] sm:$0xff]
      %v291 = vmul.f32 %v287, %v287
      %v292 = vmul.f32 %v288, %v288
      %293 = vadd.xlane.f32.xlu0 %v291
      %v294 = vpop.xlane.xlu0 %293
      %295 = vadd.xlane.f32.xlu0 %v292
      %v296 = vpop.xlane.xlu0 %295
      %v297 = vadd.f32 %v289, %v294
      %v298 = vadd.f32 %v290, %v296
      %vm299 = vcmask 7168
      %300 = vst.msk [vmem:[%s193] sm:$0xff] %vm299, %v297
      %301 = vst.msk [vmem:[%s193 + $0x8] sm:$0xff] %vm299, %v298
      %s302 = smul.u32 2, %s18
      %p303 = scmp.lt.s32.totalorder %s302, 3
      %s304 = scalar_select %p303, %s302, 3
      %s305 = smul.addr %s304, 8
      %s306 = scalar_lea.vmem %s3, %s305
      // Predicated region
      $region37: #{upsample_forward.2} parent=31 // pred_check
        %p307 = pneg %p116
      $region38: #{upsample_forward.2} parent=31 // pred_check_branch
        %309 = sbr.rel (%p307) target = $region40
      $region39: #{upsample_forward.2} parent=31 // pred_region
        %s310 = smul.u32 2, %s18
      $region40: #{upsample_forward.2} parent=31 // pred_fallthru
        _
    $region32: #{upsample_forward.2} parent=5 // pred_fallthru
      _
    %p311 = scmp.le.s32.totalorder 2, %s9
    // Predicated region
    $region41: #{upsample_forward.2} parent=5 // pred_check
      %p312 = pneg %p311
    $region42: #{upsample_forward.2} parent=5 // pred_check_branch
      %314 = sbr.rel (%p312) target = $region44
    $region43: #{upsample_forward.2} parent=5 // pred_region
      %s315 = ssub.s32 %s9, 2
      // Predicated region
      $region45: #{upsample_forward.2} parent=43 // pred_check
        %p316 = pneg %p122
      $region46: #{upsample_forward.2} parent=43 // pred_check_branch
        %318 = sbr.rel (%p316) target = $region48
      $region47: #{upsample_forward.2} parent=43 // pred_region
        %s319 = smul.u32 2, %s20
        %p320 = scmp.lt.s32.totalorder %s319, 3
        %s321 = scalar_select %p320, %s319, 3
        %s322 = smul.addr %s321, 8
        %s323 = scalar_lea.vmem %s3, %s322
      $region48: #{upsample_forward.2} parent=43 // pred_fallthru
        _
    $region44: #{upsample_forward.2} parent=5 // pred_fallthru
      _
  $region6: #{upsample_forward.2} parent=0 // loop_footer
    %s13 = sadd.s32 1, %s9
  $region7: #{upsample_forward.2} parent=0 // loop_footer_branch
    %8 = sbr.rel target = $region3
  $region8: #{upsample_forward.2} parent=0 // loop_exit
    _

// kernel: upsample_forward.3
$region0: #{upsample_forward.3}
  #allocation0 [shape = 'u32[]', space=smem, size = 0x4, offset = 0x4, fixed_abs, tag = 'smem constant byte address 0x4 - core index']
  #allocation1 [shape = 'u32[72,128]{1,0:T(1,128)}', space=vmem, size = 0x9000, scoped, tag = 'internal scratch']
  %s0 = inlined_call_operand.vmem [shape: f32[8,512], index: 0, kind: input, shape index: {}]
  %s1 = inlined_call_operand.vmem [shape: f32[16,16], index: 1, kind: input, shape index: {}]
  %s2 = inlined_call_operand.vmem [shape: f32[16,1], index: 2, kind: input, shape index: {}]
  %s3 = inlined_call_operand.vmem [shape: f32[16,512], index: 3, kind: output, shape index: {}]
  %s4 = sld [smem:[#allocation0]]
  $region79: #{upsample_forward.3} parent=0
    _
  %s6 = ssub.s32 1, %s4
  %s7 = scalar_select 0, %s6, %s4
  $region1: #{upsample_forward.3} parent=0
    #allocation2 [shape = 'u8[16384]{0}', space=vmem, size = 0x4000, scoped, tag = 'output window, operand 0']
    loop: start=0, step=1, limit=6
    $region2: #{upsample_forward.3} parent=1 // loop_pre_header
      _
    $region3: #{upsample_forward.3} parent=1 // loop_header
      %s9 = sphi 0, %s13
      %p10 = scmp.ge.s32.totalorder %s9, 6
      %s19 = sphi 0, %s21
      %s22 = sphi 0, %s19
      %s23 = sphi 0, %s22
      %s39 = sphi 0, %s23
      %s43 = sphi 0, %s43
      %s45 = sphi 0, %s43
      %s46 = sphi 0, %s45
      %s60 = sphi 0, %s46
      %s64 = sphi 0, %s64
      %s66 = sphi 0, %s64
      %s67 = sphi 0, %s66
      %s81 = sphi 0, %s67
      %s87 = sphi 0, %s89
      %s90 = sphi 0, %s87
      %s91 = sphi 0, %s90
      %s107 = sphi 0, %s91
    $region4: #{upsample_forward.3} parent=1 // loop_header_branch
      %12 = sbr.rel (%p10) target = $region8
    $region5: #{upsample_forward.3} parent=1 // loop_body
      %s14 = ssub.s32 %s9, 1
      %s15 = ssub.s32 %s9, 2
      %s16 = sadd.s32 %s9, 1
      %s17 = ssub.s32 %s9, %s16
      %p18 = scmp.eq.s32.totalorder %s17, 0
      %s20 = sadd.s32 %s19, 1
      %s21 = scalar_select %p18, %s19, %s20
      %p24 = pneg %p18
      %p25 = scmp.eq.s32.totalorder %s9, 3
      %p26 = por %p24, %p25
      %p27 = scmp.ne.s32.totalorder %s19, %s22
      %p28 = scmp.eq.s32.totalorder %s9, 0
      %p29 = por %p27, %p28
      %p30 = scmp.ne.s32.totalorder %s19, %s22
      %p31 = scmp.eq.s32.totalorder %s14, 3
      %p32 = por %p30, %p31
      %p33 = scmp.ne.s32.totalorder %s22, %s23
      %p34 = scmp.eq.s32.totalorder %s14, 0
      %p35 = por %p33, %p34
      %p36 = scmp.ne.s32.totalorder %s22, %s23
      %p37 = scmp.eq.s32.totalorder %s15, 3
      %p38 = por %p36, %p37
      %p40 = scmp.ne.s32.totalorder %s23, %s39
      %p41 = scmp.eq.s32.totalorder %s15, 0
      %p42 = por %p40, %p41
      %s44 = sadd.s32 %s43, 1
      %p47 = scmp.eq.s32.totalorder %s9, 3
      %p48 = scmp.ne.s32.totalorder %s43, %s45
      %p49 = scmp.eq.s32.totalorder %s9, 0
      %p50 = por %p48, %p49
      %p51 = scmp.ne.s32.totalorder %s43, %s45
      %p52 = scmp.eq.s32.totalorder %s14, 3
      %p53 = por %p51, %p52
      %p54 = scmp.ne.s32.totalorder %s45, %s46
      %p55 = scmp.eq.s32.totalorder %s14, 0
      %p56 = por %p54, %p55
      %p57 = scmp.ne.s32.totalorder %s45, %s46
      %p58 = scmp.eq.s32.totalorder %s15, 3
      %p59 = por %p57, %p58
      %p61 = scmp.ne.s32.totalorder %s46, %s60
      %p62 = scmp.eq.s32.totalorder %s15, 0
      %p63 = por %p61, %p62
      %s65 = sadd.s32 %s64, 1
      %p68 = scmp.eq.s32.totalorder %s9, 3
      %p69 = scmp.ne.s32.totalorder %s64, %s66
      %p70 = scmp.eq.s32.totalorder %s9, 0
      %p71 = por %p69, %p70
      %p72 = scmp.ne.s32.totalorder %s64, %s66
      %p73 = scmp.eq.s32.totalorder %s14, 3
      %p74 = por %p72, %p73
      %p75 = scmp.ne.s32.totalorder %s66, %s67
      %p76 = scmp.eq.s32.totalorder %s14, 0
      %p77 = por %p75, %p76
      %p78 = scmp.ne.s32.totalorder %s66, %s67
      %p79 = scmp.eq.s32.totalorder %s15, 3
      %p80 = por %p78, %p79
      %p82 = scmp.ne.s32.totalorder %s67, %s81
      %p83 = scmp.eq.s32.totalorder %s15, 0
      %p84 = por %p82, %p83
      %s85 = ssub.s32 %s9, %s16
      %p86 = scmp.eq.s32.totalorder %s85, 0
      %s88 = sadd.s32 %s87, 1
      %s89 = scalar_select %p86, %s87, %s88
      %p92 = pneg %p86
      %p93 = scmp.eq.s32.totalorder %s9, 3
      %p94 = por %p92, %p93
      %p95 = scmp.ne.s32.totalorder %s87, %s90
      %p96 = scmp.eq.s32.totalorder %s9, 0
      %p97 = por %p95, %p96
      %p98 = scmp.ne.s32.totalorder %s87, %s90
      %p99 = scmp.eq.s32.totalorder %s14, 3
      %p100 = por %p98, %p99
      %p101 = scmp.ne.s32.totalorder %s90, %s91
      %p102 = scmp.eq.s32.totalorder %s14, 0
      %p103 = por %p101, %p102
      %p104 = scmp.ne.s32.totalorder %s90, %s91
      %p105 = scmp.eq.s32.totalorder %s15, 3
      %p106 = por %p104, %p105
      %p108 = scmp.ne.s32.totalorder %s91, %s107
      %p109 = scmp.eq.s32.totalorder %s15, 0
      %p110 = por %p108, %p109
      %p111 = scmp.le.s32.totalorder 1, %s9
      %p112 = scmp.lt.s32.totalorder %s9, 5
      %p113 = pnand %p111, %p112
      %p114 = pneg %p113
      // Predicated region
      $region9: #{upsample_forward.3} parent=5 // pred_check
        _
      $region10: #{upsample_forward.3} parent=5 // pred_check_branch
        %116 = sbr.rel (%p113) target = $region12
      $region11: #{upsample_forward.3} parent=5 // pred_region
        %s117 = ssub.s32 %s9, 1
        // Predicated region
        $region13: #{upsample_forward.3} parent=11 // pred_check
          %p118 = pneg %p56
        $region14: #{upsample_forward.3} parent=11 // pred_check_branch
          %120 = sbr.rel (%p118) target = $region16
        $region15: #{upsample_forward.3} parent=11 // pred_region
          _
        $region16: #{upsample_forward.3} parent=11 // pred_fallthru
          _
        // Predicated region
        $region17: #{upsample_forward.3} parent=11 // pred_check
          %p121 = pneg %p77
        $region18: #{upsample_forward.3} parent=11 // pred_check_branch
          %123 = sbr.rel (%p121) target = $region20
        $region19: #{upsample_forward.3} parent=11 // pred_region
          _
        $region20: #{upsample_forward.3} parent=11 // pred_fallthru
          _
      $region12: #{upsample_forward.3} parent=5 // pred_fallthru
        _
      %p124 = scmp.lt.s32.totalorder %s9, 4
      // Predicated region
      $region21: #{upsample_forward.3} parent=5 // pred_check
        %p125 = pneg %p124
      $region22: #{upsample_forward.3} parent=5 // pred_check_branch
        %127 = sbr.rel (%p125) target = $region24
      $region23: #{upsample_forward.3} parent=5 // pred_region
        // Predicated region
        $region25: #{upsample_forward.3} parent=23 // pred_check
          %p128 = pneg %p29
        $region26: #{upsample_forward.3} parent=23 // pred_check_branch
          %130 = sbr.rel (%p128) target = $region28
        $region27: #{upsample_forward.3} parent=23 // pred_region
          %p131 = scmp.lt.s32.totalorder %s9, 3
          %s132 = scalar_select %p131, %s9, 3
          %s133 = smul.addr %s132, 8
          %s134 = scalar_lea.vmem %s0, %s133
        $region28: #{upsample_forward.3} parent=23 // pred_fallthru
          _
      $region24: #{upsample_forward.3} parent=5 // pred_fallthru
        _
      %p135 = scmp.le.s32.totalorder 1, %s9
      %p136 = scmp.lt.s32.totalorder %s9, 5
      %p137 = pnand %p135, %p136
      %p138 = pneg %p137
      // Predicated region
      $region29: #{upsample_forward.3} parent=5 // pred_check
        _
      $region30: #{upsample_forward.3} parent=5 // pred_check_branch
        %140 = sbr.rel (%p137) target = $region32
      $region31: #{upsample_forward.3} parent=5 // pred_region
        %s141 = ssub.s32 %s9, 1
        %p142 = scmp.lt.s32.totalorder %s14, 3
        %s143 = scalar_select %p142, %s14, 3
        %s144 = smul.addr %s143, 8
        %s145 = scalar_lea.vmem %s0, %s144
        %p146 = pneg %p35
        %p147 = pneg %p32
        %p148 = pneg %p56
        %p149 = pneg %p53
        %p150 = pneg %p77
        %p151 = pneg %p74
        %p152 = pneg %p103
        %p153 = pneg %p100
        %s154 = sand.u32 %s90, 1
        %s155 = sand.u32 %s90, 1
        %s156 = smul.addr %s155, 16
        %s157 = scalar_lea.vmem [#allocation2], %s156
        %p158 = scmp.lt.s32.totalorder %s14, 3
        %s159 = scalar_select %p158, %s14, 3
        %s160 = smul.addr %s159, 8
        %s161 = scalar_lea.vmem %s0, %s160
        %v162 = vld [vmem:[%s161] sm:$0xff]
        %164 = vrot.lane.b32.xlu0 %v162, 127
        %v165 = vpop.permute.xlu0 %164
        %vm167 = vcmask 1039360
        %v168 = vsel %vm167, %v165, 0.0
        %v169 = vlaneseq
        %v170 = vand.u32 %v169, 127
        %vm171 = vcmp.lt.s32.totalorder %v170, 0
        %v172 = vsub.s32 0, %v170
        %v173 = vsel %vm171, %v172, %v170
        %v174 = vshrl.u32 %v173, 4
        %v175 = vand.u32 %v173, 15
        %v176 = vsub.s32 0, %v175
        %v177 = vsel %vm171, %v176, %v175
        %vm178 = vcmp.ne.s32.totalorder %v177, 0
        %vm179 = vcmp.lt.s32.totalorder %v177, 0
        %vm180 = vmand %vm179, %vm178
        %v181 = vadd.s32 %v177, 16
        %v182 = vsel %vm180, %v181, %v177
        %vm183 = vcmp.eq.s32.totalorder %v182, 15
        %v184 = vsel %vm183, 1, 0
        %vm185 = vcmp.eq.s32.totalorder %v184, 1
        %v186 = vsel %vm185, 0.0, %v168
        %v188 = vrot.slane %v186, 4
        %v190 = vrot.slane %v162, 4
        %vm192 = vcmask 1043456
        %v193 = vsel %vm192, %v162, %v188
        %v194 = vsel %vm192, %v190, %v186
        %v195 = vld [vmem:[%s1] sm:$0xff]
        %v196 = vld [vmem:[%s1 + $0x8] sm:$0xff]
        %v197 = vld [vmem:[%s2] sm:$0xff]
        %v198 = vld [vmem:[%s2 + $0x8] sm:$0xff]
        %200 = vset.pattern.permute.xlu0 0
        %201 = vperm.xlu0 %200, %v197
        %v202 = vpop.permute.xlu0 %201
        %205 = vset.pattern.permute.xlu0 0
        %206 = vperm.xlu0 %205, %v198
        %v207 = vpop.permute.xlu0 %206
        %vm209 = vcmask 130048
        %v211 = vsel %vm209, %v195, 0
        %v214 = vsel %vm209, %v196, 0
        %216 = vmatpush.msra.mxu0 0.0
        %217 = vmatpush.msra.mxu0 0.0
        %218 = vmatpush.msra.mxu0 0.0
        %219 = vmatpush.msra.mxu0 0.0
        %220 = vmatpush.msra.mxu0 0.0
        %221 = vmatpush.msra.mxu0 0.0
        %222 = vmatpush.msra.mxu0 0.0
        %223 = vmatpush.msra.mxu0 0.0
        %224 = vmatpush.msra.mxu0 0.0
        %225 = vmatpush.msra.mxu0 0.0
        %226 = vmatpush.msra.mxu0 0.0
        %227 = vmatpush.msra.mxu0 0.0
        %228 = vmatpush.msra.mxu0 0.0
        %229 = vmatpush.msra.mxu0 0.0
        %230 = vmatpush.msra.mxu0 %v194
        %231 = vmatpush.msra.mxu0 %v193
        %232 = vmatmul.f32.gmra.mxu0 %v211
        %v233 = vpop.f32.mrf.mxu0
        %v234 = vadd.f32 %v202, %v233
        %235 = vmatmul.f32.gmra.mxu0 %v214
        %v236 = vpop.f32.mrf.mxu0
        %v237 = vadd.f32 %v207, %v236
        %238 = vdwg.mxu0
        %vm239 = vcmp.ge.f32.partialorder %v234, 0.0
        %vm240 = vcmp.ge.f32.partialorder %v237, 0.0
        %v241 = vmul.f32 %v234, 0.01
        %v242 = vmul.f32 %v237, 0.01
        %v243 = vsel %vm239, %v234, %v241
        %v244 = vsel %vm240, %v237, %v242
        %245 = vst [vmem:[%s157] sm:$0xff] %v243
        %246 = vst [vmem:[%s157 + $0x8] sm:$0xff] %v244
        %s247 = sand.u32 %s90, 1
        %s248 = sand.u32 %s90, 1
        %s249 = smul.addr %s248, 16
        %s250 = scalar_lea.vmem [#allocation2], %s249
        // Predicated region
        $region33: #{upsample_forward.3} parent=31 // pred_check
          %p251 = pneg %p100
        $region34: #{upsample_forward.3} parent=31 // pred_check_branch
          %253 = sbr.rel (%p251) target = $region36
        $region35: #{upsample_forward.3} parent=31 // pred_region
          %s254 = smul.addr %s14, 8
          %s255 = scalar_lea.vmem %s3, %s254
          // Predicated region
          $region37: #{upsample_forward.3} parent=35 // pred_check
            _
          $region38: #{upsample_forward.3} parent=35 // pred_check_branch
            %257 = sbr.rel (0) target = $region40
          $region39: #{upsample_forward.3} parent=35 // pred_region
            // Predicated region
            $region41: #{upsample_forward.3} parent=39 // pred_check
              _
            $region42: #{upsample_forward.3} parent=39 // pred_check_branch
              %259 = sbr.rel (0) target = $region44
            $region43: #{upsample_forward.3} parent=39 // pred_region
              // Predicated region
              $region56: #{upsample_forward.3} parent=43 // pred_check
                _
              $region57: #{upsample_forward.3} parent=43 // pred_check_branch
                %277 = sbr.rel (0) target = $region59
              $region58: #{upsample_forward.3} parent=43 // pred_region
                loop: start=0, step=1, limit=1
                $region60: #{upsample_forward.3} parent=58 // loop_pre_header
                  _
                $region61: #{upsample_forward.3} parent=58 // loop_header
                  %s279 = sphi 0, %s283
                  %p280 = scmp.ge.s32.totalorder %s279, 1
                  %s284 = sphi %s250, %s250
                  %s285 = sphi %s255, %s255
                $region62: #{upsample_forward.3} parent=58 // loop_header_branch
                  %282 = sbr.rel (%p280) target = $region66
                $region63: #{upsample_forward.3} parent=58 // loop_body
                  %v286 = vld [vmem:[%s284] sm:$0xff]
                  %287 = vst [vmem:[%s285] sm:$0xff] %v286
                  %v288 = vld [vmem:[%s284 + $0x8] sm:$0xff]
                  %289 = vst [vmem:[%s285 + $0x20] sm:$0xff] %v288
                $region64: #{upsample_forward.3} parent=58 // loop_footer
                  %s283 = sadd.s32 1, %s279
                $region65: #{upsample_forward.3} parent=58 // loop_footer_branch
                  %278 = sbr.rel target = $region61
                $region66: #{upsample_forward.3} parent=58 // loop_exit
                  _
              $region59: #{upsample_forward.3} parent=43 // pred_fallthru
                _
              // Predicated region
              $region67: #{upsample_forward.3} parent=43 // pred_check
                _
              $region68: #{upsample_forward.3} parent=43 // pred_check_branch
                %291 = sbr.rel target = $region70
              $region69: #{upsample_forward.3} parent=43 // pred_region
                _
              $region70: #{upsample_forward.3} parent=43 // pred_fallthru
                _
            $region44: #{upsample_forward.3} parent=39 // pred_fallthru
              _
            // Predicated region
            $region45: #{upsample_forward.3} parent=39 // pred_check
              _
            $region46: #{upsample_forward.3} parent=39 // pred_check_branch
              %261 = sbr.rel target = $region48
            $region47: #{upsample_forward.3} parent=39 // pred_region
              %s263 = ssub.s32 256, 1
              loop: start=0, step=1, limit=1
              $region49: #{upsample_forward.3} parent=47 // loop_pre_header
                _
              $region50: #{upsample_forward.3} parent=47 // loop_header
                %s265 = sphi 0, %s269
                %p266 = scmp.ge.s32.totalorder %s265, 1
                %s270 = sphi %s250, %s250
                %s271 = sphi %s255, %s255
              $region51: #{upsample_forward.3} parent=47 // loop_header_branch
                %268 = sbr.rel (%p266) target = $region55
              $region52: #{upsample_forward.3} parent=47 // loop_body
                %v272 = vld [vmem:[%s270] sm:%s263]
                %273 = vst [vmem:[%s271] sm:%s263] %v272
                %v274 = vld [vmem:[%s270 + $0x8] sm:%s263]
                %275 = vst [vmem:[%s271 + $0x20] sm:%s263] %v274
              $region53: #{upsample_forward.3} parent=47 // loop_footer
                %s269 = sadd.s32 1, %s265
              $region54: #{upsample_forward.3} parent=47 // loop_footer_branch
                %264 = sbr.rel target = $region50
              $region55: #{upsample_forward.3} parent=47 // loop_exit
                _
            $region48: #{upsample_forward.3} parent=39 // pred_fallthru
              _
          $region40: #{upsample_forward.3} parent=35 // pred_fallthru
            _
          %292 = vnop
        $region36: #{upsample_forward.3} parent=31 // pred_fallthru
          _
      $region32: #{upsample_forward.3} parent=5 // pred_fallthru
        _
      %p293 = scmp.le.s32.totalorder 2, %s9
      // Predicated region
      $region71: #{upsample_forward.3} parent=5 // pred_check
        %p294 = pneg %p293
      $region72: #{upsample_forward.3} parent=5 // pred_check_branch
        %296 = sbr.rel (%p294) target = $region74
      $region73: #{upsample_forward.3} parent=5 // pred_region
        %s297 = ssub.s32 %s9, 2
        // Predicated region
        $region75: #{upsample_forward.3} parent=73 // pred_check
          %p298 = pneg %p106
        $region76: #{upsample_forward.3} parent=73 // pred_check_branch
          %300 = sbr.rel (%p298) target = $region78
        $region77: #{upsample_forward.3} parent=73 // pred_region
          %s301 = sand.u32 %s91, 1
          %s302 = sand.u32 %s91, 1
          %s303 = smul.addr %s302, 16
          %s304 = scalar_lea.vmem [#allocation2], %s303
        $region78: #{upsample_forward.3} parent=73 // pred_fallthru
          _
      $region74: #{upsample_forward.3} parent=5 // pred_fallthru
        _
    $region6: #{upsample_forward.3} parent=1 // loop_footer
      %s13 = sadd.s32 1, %s9
    $region7: #{upsample_forward.3} parent=1 // loop_footer_branch
      %8 = sbr.rel target = $region3
    $region8: #{upsample_forward.3} parent=1 // loop_exit
      _

</llo_original>
